<compile_context>
chip_gen: v6e
topology: v6e:2x2x1
jax: 0.10.0
libtpu: 0.0.40
codegen_flags: <defaults>
</compile_context>

<pallas_src>
import functools
import math

import jax
import jax.numpy as jnp
from jax.experimental import pallas as pl
from jax.experimental.pallas import tpu as pltpu

MXU_DTYPE = jnp.bfloat16          # matmul operand dtype (accumulation stays float32)
_VMEM_LIMIT = 48 * 1024 * 1024    # < v7x 64 MiB physical, > v5e 16 MiB scoped default


# ----------------------------------------------------------------------------- helpers
def _round_up(x: int, m: int) -> int:
    return ((x + m - 1) // m) * m


def _choose_tile(dim: int, max_tile: int, align: int) -> int:
    """Full dim if small (always legal); else the largest `align`-multiple <= max_tile
    that divides dim (so no padding); else an `align`-multiple max tile (wrapper pads)."""
    if dim <= max_tile:
        return dim
    t = (max_tile // align) * align
    while t >= align:
        if dim % t == 0:
            return t
        t -= align
    return (max_tile // align) * align


def _pad_to(a: jax.Array, shape) -> jax.Array:
    pads = [(0, t - s) for s, t in zip(a.shape, shape)]
    if all(p == (0, 0) for p in pads):
        return a
    return jnp.pad(a, pads)


# ------------------------------------------------------------ generic linear (+fused SiLU)
def _linear_kernel(x_ref, w_ref, b_ref, o_ref, acc_ref, *, act):
    @pl.when(pl.program_id(2) == 0)
    def _():
        acc_ref[...] = jnp.zeros_like(acc_ref)

    xv = x_ref[...].astype(jnp.float32)
    if act == "silu":                           # elementwise -> exact per K-tile
        xv = xv * jax.nn.sigmoid(xv)
    acc_ref[...] += jnp.dot(xv.astype(MXU_DTYPE), w_ref[...].astype(MXU_DTYPE),
                            preferred_element_type=jnp.float32)

    @pl.when(pl.program_id(2) == pl.num_programs(2) - 1)
    def _():
        o_ref[...] = (acc_ref[...] + b_ref[...].astype(jnp.float32)).astype(o_ref.dtype)


def linear(x, w, b, *, act=None, tm_max=512, tn_max=512, tk_max=512):
    """y = act(x) @ w + b with x:(M,K), w:(K,N) (= torch weight.T), b:(N,)."""
    M, K = x.shape
    K2, N = w.shape
    assert K == K2 and b.shape == (N,)
    tm = _choose_tile(M, tm_max, 8)
    tk = _choose_tile(K, tk_max, 128)
    tn = _choose_tile(N, tn_max, 128)
    Mp, Kp, Np = _round_up(M, tm), _round_up(K, tk), _round_up(N, tn)
    xp, wp = _pad_to(x, (Mp, Kp)), _pad_to(w, (Kp, Np))
    bp = _pad_to(b.reshape(1, N), (1, Np))

    out = pl.pallas_call(
        functools.partial(_linear_kernel, act=act),
        out_shape=jax.ShapeDtypeStruct((Mp, Np), x.dtype),
        grid_spec=pltpu.PrefetchScalarGridSpec(
            num_scalar_prefetch=0,
            grid=(Mp // tm, Np // tn, Kp // tk),
            in_specs=[
                pl.BlockSpec((tm, tk), lambda i, j, k: (i, k)),
                pl.BlockSpec((tk, tn), lambda i, j, k: (k, j)),
                pl.BlockSpec((1, tn), lambda i, j, k: (0, j)),
            ],
            out_specs=pl.BlockSpec((tm, tn), lambda i, j, k: (i, j)),
            scratch_shapes=[pltpu.VMEM((tm, tn), jnp.float32)],
        ),
        compiler_params=pltpu.CompilerParams(
            dimension_semantics=("parallel", "parallel", "arbitrary"),
            vmem_limit_bytes=_VMEM_LIMIT),
    )(xp, wp, bp)
    return out[:M, :N] if (Mp, Np) != (M, N) else out


# -------------------------------------------- fused pre-norm + modulation + linear1
def _prenorm_linear1_kernel(x_ref, scale_ref, shift_ref, w_ref, b_ref, o_ref):
    x = x_ref[...].astype(jnp.float32)                        # (tl, H) full-H rows
    mean = jnp.mean(x, axis=-1, keepdims=True)
    xc = x - mean
    var = jnp.mean(xc * xc, axis=-1, keepdims=True)
    normed = xc * jax.lax.rsqrt(var + 1e-6)                   # LayerNorm, no affine
    xm = (1.0 + scale_ref[...].astype(jnp.float32)) * normed \
         + shift_ref[...].astype(jnp.float32)
    acc = jnp.dot(xm.astype(MXU_DTYPE), w_ref[...].astype(MXU_DTYPE),
                  preferred_element_type=jnp.float32)
    o_ref[...] = (acc + b_ref[...].astype(jnp.float32)).astype(o_ref.dtype)


def prenorm_linear1(x, scale, shift, w, b, *, tl_max=256, tn_max=512):
    """((1 + scale) * LayerNorm(x) + shift) @ w1 + b1, x_mod never hits HBM."""
    B, L, H = x.shape
    H2, F = w.shape
    assert H == H2 and b.shape == (F,)
    tl = _choose_tile(L, tl_max, 8)
    tn = _choose_tile(F, tn_max, 128)
    Lp, Fp = _round_up(L, tl), _round_up(F, tn)
    xp = _pad_to(x, (B, Lp, H))
    wp = _pad_to(w, (H, Fp))
    bp = _pad_to(b.reshape(1, F), (1, Fp))
    sc = scale.reshape(B, 1, H)
    sh = shift.reshape(B, 1, H)

    out = pl.pallas_call(
        _prenorm_linear1_kernel,
        out_shape=jax.ShapeDtypeStruct((B, Lp, Fp), x.dtype),
        grid_spec=pltpu.PrefetchScalarGridSpec(
            num_scalar_prefetch=0,
            grid=(B, Lp // tl, Fp // tn),
            in_specs=[
                pl.BlockSpec((None, tl, H), lambda b, i, j: (b, i, 0)),
                pl.BlockSpec((None, 1, H), lambda b, i, j: (b, 0, 0)),
                pl.BlockSpec((None, 1, H), lambda b, i, j: (b, 0, 0)),
                pl.BlockSpec((H, tn), lambda b, i, j: (0, j)),
                pl.BlockSpec((1, tn), lambda b, i, j: (0, j)),
            ],
            out_specs=pl.BlockSpec((None, tl, tn), lambda b, i, j: (b, i, j)),
        ),
        compiler_params=pltpu.CompilerParams(
            dimension_semantics=("parallel", "parallel", "parallel"),
            vmem_limit_bytes=_VMEM_LIMIT),
    )(xp, sc, sh, wp, bp)
    return out[:, :L, :F] if (Lp, Fp) != (L, F) else out


# ------------------------------------------- QK-RMSNorm + flash (online-softmax) attention
def _flash_attn_kernel(q_ref, k_ref, v_ref, qs_ref, ks_ref, o_ref,
                       m_sc, l_sc, acc_sc, *, sm_scale, kv_len, tkv):
    ki = pl.program_id(2)

    @pl.when(ki == 0)
    def _():
        m_sc[...] = jnp.full_like(m_sc, -jnp.inf)
        l_sc[...] = jnp.zeros_like(l_sc)
        acc_sc[...] = jnp.zeros_like(acc_sc)

    def _rms(t, s_ref):
        rrms = jax.lax.rsqrt(jnp.mean(t * t, axis=-1, keepdims=True) + 1e-6)
        return t * rrms * s_ref[...].astype(jnp.float32)

    qn = _rms(q_ref[...].astype(jnp.float32), qs_ref)         # (tq,  D)
    kn = _rms(k_ref[...].astype(jnp.float32), ks_ref)         # (tkv, D)
    s = jax.lax.dot_general(qn.astype(MXU_DTYPE), kn.astype(MXU_DTYPE),
                            (((1,), (1,)), ((), ())),
                            preferred_element_type=jnp.float32) * sm_scale
    if kv_len is not None:                                    # mask padded KV columns
        pos = ki * tkv + jax.lax.broadcasted_iota(jnp.int32, s.shape, 1)
        s = jnp.where(pos < kv_len, s, -jnp.inf)

    m_prev = m_sc[...]
    m_new = jnp.maximum(m_prev, jnp.max(s, axis=-1, keepdims=True))
    alpha = jnp.exp(m_prev - m_new)
    p = jnp.exp(s - m_new)
    l_sc[...] = alpha * l_sc[...] + jnp.sum(p, axis=-1, keepdims=True)
    acc_sc[...] = alpha * acc_sc[...] + jnp.dot(
        p.astype(MXU_DTYPE), v_ref[...].astype(MXU_DTYPE),
        preferred_element_type=jnp.float32)
    m_sc[...] = m_new

    @pl.when(ki == pl.num_programs(2) - 1)                    # deferred normalization
    def _():
        o_ref[...] = (acc_sc[...] *
                      pl.reciprocal(l_sc[...], approx=True)).astype(o_ref.dtype)


def flash_attention(q, k, v, q_scale, k_scale, *, tq_max=256, tkv_max=512):
    """softmax(RMS(q) RMS(k)^T / sqrt(D)) RMS-free(v) over (B*heads, L, D) arrays."""
    G, L, D = q.shape
    tq = _choose_tile(L, tq_max, 8)
    tkv = _choose_tile(L, tkv_max, 8)
    Lq, Lk = _round_up(L, tq), _round_up(L, tkv)
    qp = _pad_to(q, (G, Lq, D))
    kp = _pad_to(k, (G, Lk, D))
    vp = _pad_to(v, (G, Lk, D))
    qs = q_scale.reshape(1, D).astype(jnp.float32)
    ks = k_scale.reshape(1, D).astype(jnp.float32)

    out = pl.pallas_call(
        functools.partial(_flash_attn_kernel, sm_scale=1.0 / math.sqrt(D),
                          kv_len=(L if Lk != L else None), tkv=tkv),
        out_shape=jax.ShapeDtypeStruct((G, Lq, D), q.dtype),
        grid_spec=pltpu.PrefetchScalarGridSpec(
            num_scalar_prefetch=0,
            grid=(G, Lq // tq, Lk // tkv),
            in_specs=[
                pl.BlockSpec((None, tq, D), lambda g, qi, ki: (g, qi, 0)),
                pl.BlockSpec((None, tkv, D), lambda g, qi, ki: (g, ki, 0)),
                pl.BlockSpec((None, tkv, D), lambda g, qi, ki: (g, ki, 0)),
                pl.BlockSpec((1, D), lambda g, qi, ki: (0, 0)),
                pl.BlockSpec((1, D), lambda g, qi, ki: (0, 0)),
            ],
            out_specs=pl.BlockSpec((None, tq, D), lambda g, qi, ki: (g, qi, 0)),
            scratch_shapes=[
                pltpu.VMEM((tq, 1), jnp.float32),             # running max
                pltpu.VMEM((tq, 1), jnp.float32),             # running denom
                pltpu.VMEM((tq, D), jnp.float32),             # running acc
            ],
        ),
        compiler_params=pltpu.CompilerParams(
            dimension_semantics=("parallel", "parallel", "arbitrary"),
            vmem_limit_bytes=_VMEM_LIMIT),
    )(qp, kp, vp, qs, ks)
    return out[:, :L, :] if Lq != L else out


# ------------------------ fused linear2: [attn | GELU(mlp)] @ w2 + b2, gate*out + residual
def _linear2_kernel(attn_ref, mlp_ref, w2a_ref, w2b_ref, b_ref, gate_ref, x_ref,
                    o_ref, acc_ref, *, ka):
    k = pl.program_id(3)

    @pl.when(k == 0)
    def _():
        acc_ref[...] = jnp.zeros_like(acc_ref)

    @pl.when(k < ka)                                          # attn K-phase
    def _():
        acc_ref[...] += jnp.dot(attn_ref[...].astype(MXU_DTYPE),
                                w2a_ref[...].astype(MXU_DTYPE),
                                preferred_element_type=jnp.float32)

    @pl.when(k >= ka)                                         # mlp K-phase, fused tanh-GELU
    def _():
        m = mlp_ref[...].astype(jnp.float32)
        c = 0.7978845608028654                                # sqrt(2/pi)
        g = 0.5 * m * (1.0 + jnp.tanh(c * (m + 0.044715 * m * m * m)))
        acc_ref[...] += jnp.dot(g.astype(MXU_DTYPE), w2b_ref[...].astype(MXU_DTYPE),
                                preferred_element_type=jnp.float32)

    @pl.when(k == pl.num_programs(3) - 1)                     # fused gate * out + residual
    def _():
        out = acc_ref[...] + b_ref[...].astype(jnp.float32)
        o_ref[...] = (x_ref[...].astype(jnp.float32)
                      + gate_ref[...].astype(jnp.float32) * out).astype(o_ref.dtype)


def linear2_gelu_gate_residual(x, attn, mlp, gate, w2a, w2b, b2, *,
                               tl_max=512, tn_max=512, tk_max=512):
    """x + gate * (attn @ w2a + gelu_tanh(mlp) @ w2b + b2), single HBM pass."""
    B, L, H = x.shape
    MH = mlp.shape[-1]
    N = w2a.shape[1]
    assert attn.shape == (B, L, H) and w2a.shape[0] == H and w2b.shape == (MH, N)
    tl = _choose_tile(L, tl_max, 8)
    tn = _choose_tile(N, tn_max, 128)
    tka = _choose_tile(H, tk_max, 128)
    tkb = _choose_tile(MH, tk_max, 128)
    Lp, Np = _round_up(L, tl), _round_up(N, tn)
    Hp, MHp = _round_up(H, tka), _round_up(MH, tkb)
    ka, kb = Hp // tka, MHp // tkb

    xp = _pad_to(x, (B, Lp, Np))
    attnp = _pad_to(attn, (B, Lp, Hp))
    mlpp = _pad_to(mlp, (B, Lp, MHp))
    w2ap = _pad_to(w2a, (Hp, Np))
    w2bp = _pad_to(w2b, (MHp, Np))
    b2p = _pad_to(b2.reshape(1, N), (1, Np))
    gp = _pad_to(gate.reshape(B, 1, N), (B, 1, Np))

    out = pl.pallas_call(
        functools.partial(_linear2_kernel, ka=ka),
        out_shape=jax.ShapeDtypeStruct((B, Lp, Np), x.dtype),
        grid_spec=pltpu.PrefetchScalarGridSpec(
            num_scalar_prefetch=0,
            grid=(B, Lp // tl, Np // tn, ka + kb),
            in_specs=[
                # attn / w2a indices clamp during the mlp phase (no re-DMA, unused then)
                pl.BlockSpec((None, tl, tka),
                             lambda b, i, j, k: (b, i, jnp.minimum(k, ka - 1))),
                pl.BlockSpec((None, tl, tkb),
                             lambda b, i, j, k: (b, i, jnp.maximum(k - ka, 0))),
                pl.BlockSpec((tka, tn),
                             lambda b, i, j, k: (jnp.minimum(k, ka - 1), j)),
                pl.BlockSpec((tkb, tn),
                             lambda b, i, j, k: (jnp.maximum(k - ka, 0), j)),
                pl.BlockSpec((1, tn), lambda b, i, j, k: (0, j)),
                pl.BlockSpec((None, 1, tn), lambda b, i, j, k: (b, 0, j)),
                pl.BlockSpec((None, tl, tn), lambda b, i, j, k: (b, i, j)),
            ],
            out_specs=pl.BlockSpec((None, tl, tn), lambda b, i, j, k: (b, i, j)),
            scratch_shapes=[pltpu.VMEM((tl, tn), jnp.float32)],
        ),
        compiler_params=pltpu.CompilerParams(
            dimension_semantics=("parallel", "parallel", "parallel", "arbitrary"),
            vmem_limit_bytes=_VMEM_LIMIT),
    )(attnp, mlpp, w2ap, w2bp, b2p, gp, xp)
    return out[:, :L, :N] if (Lp, Np) != (L, N) else out


# ------------------------------------------------------------------ full block forward
def single_stream_block(x, vec, pe, params, num_heads):
    del pe  # unused in the reference forward (SDPA is called without pe)
    B, L, H = x.shape
    D = H // num_heads

    # Modulation: Linear(silu(vec)) -> shift, scale, gate  (double=False => 3 chunks).
    mod = linear(vec, params["w_mod"], params["b_mod"], act="silu")         # (B, 3H)
    shift, scale, gate = mod[:, :H], mod[:, H:2 * H], mod[:, 2 * H:]

    # Fused pre-norm + modulation + linear1 -> [q | k | v | mlp]  (x_mod never in HBM).
    lin1 = prenorm_linear1(x, scale, shift, params["w1"], params["b1"])     # (B, L, 3H+MH)

    # Split heads: 'B L (K H D) -> K B H L D', heads folded into the leading grid axis.
    # TODO(synk): when D % 128 == 0 the q/k/v slices and attn output could stay in (B, L, H)
    # layout via lane-dense per-head column blocks; at these head dims we keep the cheap
    # XLA transposes instead (layout constraint: block last dim must be 128-mult or full).
    qkv = lin1[..., :3 * H].reshape(B, L, 3, num_heads, D)
    q = qkv[:, :, 0].transpose(0, 2, 1, 3).reshape(B * num_heads, L, D)
    k = qkv[:, :, 1].transpose(0, 2, 1, 3).reshape(B * num_heads, L, D)
    v = qkv[:, :, 2].transpose(0, 2, 1, 3).reshape(B * num_heads, L, D)
    mlp = lin1[..., 3 * H:]                                                 # (B, L, MH)

    attn = flash_attention(q, k, v, params["q_scale"], params["k_scale"])   # (B*nh, L, D)
    attn = attn.reshape(B, num_heads, L, D).transpose(0, 2, 1, 3).reshape(B, L, H)

    # Fused linear2: GELU on the mlp K-phase, no concat, gate*out + residual in the epilogue.
    return linear2_gelu_gate_residual(x, attn, mlp, gate,
                                      params["w2a"], params["w2b"], params["b2"])


# ------------------------------------------------------------------ pure-JAX reference
def single_stream_block_ref(x, vec, pe, params, num_heads):
    del pe
    B, L, H = x.shape
    D = H // num_heads
    mod = jax.nn.silu(vec) @ params["w_mod"] + params["b_mod"]
    shift, scale, gate = mod[:, :H], mod[:, H:2 * H], mod[:, 2 * H:]

    mean = jnp.mean(x, -1, keepdims=True)
    var = jnp.mean((x - mean) ** 2, -1, keepdims=True)
    normed = (x - mean) * jax.lax.rsqrt(var + 1e-6)
    x_mod = (1.0 + scale[:, None, :]) * normed + shift[:, None, :]

    lin1 = x_mod @ params["w1"] + params["b1"]
    qkv, mlp = lin1[..., :3 * H], lin1[..., 3 * H:]
    qkv = qkv.reshape(B, L, 3, num_heads, D).transpose(2, 0, 3, 1, 4)
    q, k, v = qkv[0], qkv[1], qkv[2]

    def rms(t, s):
        rrms = jax.lax.rsqrt(jnp.mean(t * t, -1, keepdims=True) + 1e-6)
        return t * rrms * s

    q = rms(q, params["q_scale"])
    k = rms(k, params["k_scale"])
    s = jnp.einsum("bhqd,bhkd->bhqk", q, k) / math.sqrt(D)
    p = jax.nn.softmax(s, axis=-1)
    attn = jnp.einsum("bhqk,bhkd->bhqd", p, v)
    attn = attn.transpose(0, 2, 1, 3).reshape(B, L, H)

    c = 0.7978845608028654
    mlp_g = 0.5 * mlp * (1.0 + jnp.tanh(c * (mlp + 0.044715 * mlp ** 3)))
    out = attn @ params["w2a"] + mlp_g @ params["w2b"] + params["b2"]
    return x + gate[:, None, :] * out


# ----------------------------------------------------------------------------- main
if __name__ == "__main__":
    B, L, hidden, num_heads = 2, 8, 32, 4
    mlp_hidden = int(hidden * 4.0)
    head_dim = hidden // num_heads

    key = jax.random.PRNGKey(0)
    ks = jax.random.split(key, 9)
    x = jax.random.normal(ks[0], (B, L, hidden), dtype=jnp.float32)
    vec = jax.random.normal(ks[1], (B, hidden), dtype=jnp.float32)
    pe = jax.random.normal(ks[2], (B, L, head_dim), dtype=jnp.float32)  # unused by forward

    def w(k_, shape, s=0.05):
        return jax.random.normal(k_, shape, dtype=jnp.float32) * s

    # Weights stored pre-transposed as (in, out) == torch nn.Linear.weight.T.
    # w2 is split into its attn / mlp row blocks once at init (hoisted out of the forward).
    w2_full = w(ks[7], (hidden + mlp_hidden, hidden))
    params = dict(
        w_mod=w(ks[3], (hidden, 3 * hidden)),
        b_mod=w(ks[4], (3 * hidden,)),
        w1=w(ks[5], (hidden, 3 * hidden + mlp_hidden)),
        b1=w(ks[6], (3 * hidden + mlp_hidden,)),
        w2a=w2_full[:hidden],
        w2b=w2_full[hidden:],
        b2=w(ks[8], (hidden,)),
        q_scale=jnp.ones((head_dim,), jnp.float32),   # RMSNorm init: torch.ones(dim)
        k_scale=jnp.ones((head_dim,), jnp.float32),
    )

    out = single_stream_block(x, vec, pe, params, num_heads)
    out = jax.block_until_ready(out)

    ref = single_stream_block_ref(x, vec, pe, params, num_heads)
    assert out.shape == x.shape
    max_err = float(jnp.max(jnp.abs(out - ref)))
    assert jnp.allclose(out, ref, atol=2e-2, rtol=2e-2), max_err

    print("KERNEL_OK")
</pallas_src>

<mosaic_0001>
module attributes {stable_mosaic.version = 11 : i64} {
  func.func @_linear_kernel(%arg0: i32, %arg1: i32, %arg2: i32, %arg3: memref<2x32xf32, #tpu.memory_space<vmem>>, %arg4: memref<32x96xf32, #tpu.memory_space<vmem>>, %arg5: memref<1x96xf32, #tpu.memory_space<vmem>>, %arg6: memref<2x96xf32, #tpu.memory_space<vmem>>, %arg7: memref<2x96xf32, #tpu.memory_space<vmem>>) attributes {dimension_semantics = [#tpu.dimension_semantics<parallel>, #tpu.dimension_semantics<parallel>, #tpu.dimension_semantics<arbitrary>], iteration_bounds = array<i64: 1, 1, 1>, scalar_prefetch = 0 : i64, scratch_operands = 1 : i64, tpu.core_type = #tpu.core_type<tc>, window_params = [{transform_indices = @transform_0, window_bounds = array<i64: 2, 32>}, {transform_indices = @transform_1, window_bounds = array<i64: 32, 96>}, {transform_indices = @transform_2, window_bounds = array<i64: 1, 96>}, {transform_indices = @transform_3, window_bounds = array<i64: 2, 96>}]} {
    %c0_i32 = arith.constant 0 : i32
    %0 = arith.cmpi eq, %arg2, %c0_i32 : i32
    %1 = arith.extui %0 : i1 to i32
    %c0_i32_0 = arith.constant 0 : i32
    %2 = arith.cmpi ne, %1, %c0_i32_0 : i32
    scf.if %2 {
      %cst_11 = arith.constant 0.000000e+00 : f32
      %20 = vector.broadcast %cst_11 : f32 to vector<2x96xf32>
      %c0_12 = arith.constant 0 : index
      %c0_13 = arith.constant 0 : index
      %21 = vector.load %arg7[%c0_12, %c0_13] : memref<2x96xf32, #tpu.memory_space<vmem>>, vector<2x96xf32>
      tpu.vector_store %arg7[%c0_12, %c0_13], %20 {strides = array<i32>} : memref<2x96xf32, #tpu.memory_space<vmem>>, vector<2x96xf32>,
    } else {
    }
    %c0 = arith.constant 0 : index
    %c0_1 = arith.constant 0 : index
    %3 = vector.load %arg3[%c0, %c0_1] : memref<2x32xf32, #tpu.memory_space<vmem>>, vector<2x32xf32>
    %4 = arith.negf %3 : vector<2x32xf32>
    %5 = math.exp %4 : vector<2x32xf32>
    %cst = arith.constant 1.000000e+00 : f32
    %6 = vector.broadcast %cst : f32 to vector<2x32xf32>
    %7 = arith.addf %6, %5 : vector<2x32xf32>
    %8 = arith.divf %6, %7 : vector<2x32xf32>
    %9 = arith.mulf %3, %8 : vector<2x32xf32>
    %c0_2 = arith.constant 0 : index
    %c0_3 = arith.constant 0 : index
    %10 = vector.load %arg7[%c0_2, %c0_3] : memref<2x96xf32, #tpu.memory_space<vmem>>, vector<2x96xf32>
    %11 = arith.truncf %9 : vector<2x32xf32> to vector<2x32xbf16>
    %c0_4 = arith.constant 0 : index
    %c0_5 = arith.constant 0 : index
    %12 = vector.load %arg4[%c0_4, %c0_5] : memref<32x96xf32, #tpu.memory_space<vmem>>, vector<32x96xf32>
    %13 = arith.truncf %12 : vector<32x96xf32> to vector<32x96xbf16>
    %cst_6 = arith.constant dense<0.000000e+00> : vector<2x96xf32>
    %14 = tpu.matmul %11, %13, %cst_6 {dimension_numbers = #tpu.dot_dimension_numbers<[1], [0], [0], [1], [0, 0, 1, 1], [], []>} : vector<2x32xbf16>, vector<32x96xbf16>, vector<2x96xf32> -> vector<2x96xf32>
    %15 = arith.addf %10, %14 : vector<2x96xf32>
    %c0_7 = arith.constant 0 : index
    %c0_8 = arith.constant 0 : index
    %16 = vector.load %arg7[%c0_7, %c0_8] : memref<2x96xf32, #tpu.memory_space<vmem>>, vector<2x96xf32>
    tpu.vector_store %arg7[%c0_7, %c0_8], %15 {strides = array<i32>} : memref<2x96xf32, #tpu.memory_space<vmem>>, vector<2x96xf32>,
    %c0_i32_9 = arith.constant 0 : i32
    %17 = arith.cmpi eq, %arg2, %c0_i32_9 : i32
    %18 = arith.extui %17 : i1 to i32
    %c0_i32_10 = arith.constant 0 : i32
    %19 = arith.cmpi ne, %18, %c0_i32_10 : i32
    scf.if %19 {
      %c0_11 = arith.constant 0 : index
      %c0_12 = arith.constant 0 : index
      %20 = vector.load %arg7[%c0_11, %c0_12] : memref<2x96xf32, #tpu.memory_space<vmem>>, vector<2x96xf32>
      %c0_13 = arith.constant 0 : index
      %c0_14 = arith.constant 0 : index
      %21 = vector.load %arg5[%c0_13, %c0_14] : memref<1x96xf32, #tpu.memory_space<vmem>>, vector<1x96xf32>
      %22 = vector.broadcast %21 : vector<1x96xf32> to vector<2x96xf32>
      %23 = arith.addf %20, %22 : vector<2x96xf32>
      %c0_15 = arith.constant 0 : index
      %c0_16 = arith.constant 0 : index
      %24 = vector.load %arg6[%c0_15, %c0_16] : memref<2x96xf32, #tpu.memory_space<vmem>>, vector<2x96xf32>
      tpu.vector_store %arg6[%c0_15, %c0_16], %23 {strides = array<i32>} : memref<2x96xf32, #tpu.memory_space<vmem>>, vector<2x96xf32>,
    } else {
    }
    return
  }
  func.func @transform_0(%arg0: i32, %arg1: i32, %arg2: i32) -> (i32, i32) {
    %c0_i32 = arith.constant 0 : i32
    return %arg0, %arg2 : i32, i32
  }
  func.func @transform_1(%arg0: i32, %arg1: i32, %arg2: i32) -> (i32, i32) {
    %c0_i32 = arith.constant 0 : i32
    return %arg2, %arg1 : i32, i32
  }
  func.func @transform_2(%arg0: i32, %arg1: i32, %arg2: i32) -> (i32, i32) {
    %c0_i32 = arith.constant 0 : i32
    %c0_i32_0 = arith.constant 0 : i32
    return %c0_i32, %arg1 : i32, i32
  }
  func.func @transform_3(%arg0: i32, %arg1: i32, %arg2: i32) -> (i32, i32) {
    %c0_i32 = arith.constant 0 : i32
    return %arg0, %arg1 : i32, i32
  }
}

</mosaic_0001>

<llo_original>
// kernel: tpu_custom_call.1
$region0: #{tpu_custom_call.1}
  #allocation0 [shape = 'u32[]', space=smem, size = 0x4, offset = 0x4, fixed_abs, tag = 'smem constant byte address 0x4 - core index']
  #allocation1 [shape = 'u32[144,128]{1,0:T(1,128)}', space=vmem, size = 0x12000, scoped, tag = 'internal scratch']
  #allocation2 [shape = 'f32[2,96]{1,0:T(2,128)}', space=vmem, size = 0x400, scoped, tag = 'scratch operand']
  %s0 = inlined_call_operand.hbm [shape: f32[2,32], index: 0, kind: input, shape index: {}]
  %s1 = inlined_call_operand.hbm [shape: f32[32,96], index: 1, kind: input, shape index: {}]
  %s2 = inlined_call_operand.vmem [shape: f32[1,96], index: 2, kind: input, shape index: {}]
  %s3 = inlined_call_operand.hbm [shape: f32[2,96], index: 3, kind: output, shape index: {}]
  %s4 = sld [smem:[#allocation0]]
  $region38: #{tpu_custom_call.1} parent=0
    _
  %s6 = ssub.s32 1, %s4
  %s7 = scalar_select 0, %s6, %s4
  $region1: #{tpu_custom_call.1} parent=0
    #allocation3 [shape = 'u8[1024]{0}', space=vmem, size = 0x400, scoped, tag = 'input window, operand 0, single buffered']
    #allocation4 [shape = 's32[1]{0}', space=sflag, size = 0x4, scoped, tag = 'scoped memory for tpu_custom_call.1']
    #allocation5 [shape = 's32[1]{0}', space=sflag, size = 0x4, scoped, tag = 'scoped memory for tpu_custom_call.1']
    #allocation6 [shape = 'u8[16384]{0}', space=vmem, size = 0x4000, scoped, tag = 'input window, operand 1, single buffered']
    #allocation7 [shape = 's32[1]{0}', space=sflag, size = 0x4, scoped, tag = 'scoped memory for tpu_custom_call.1']
    #allocation8 [shape = 'u8[1024]{0}', space=vmem, size = 0x400, scoped, tag = 'output window, operand 0, single buffered']
    %8 = vsyncpa [#allocation4], 0
    %9 = vsyncpa [#allocation7], 0
    %10 = vsyncpa [#allocation5], 0
    // Predicated region
    $region2: #{tpu_custom_call.1} parent=1 // pred_check
      _
    $region3: #{tpu_custom_call.1} parent=1 // pred_check_branch
      %12 = sbr.rel (0) target = $region5
    $region4: #{tpu_custom_call.1} parent=1 // pred_region
      %s14 = ssub.s32 32, 32
      %15 = vsyncadd [#allocation4], %s14
      %s17 = sshll.u32 [#allocation3], 4
      %s18 = int_to_ptr.vmem [resolvable:$true] %s17
      %20 = dma.hbm_to_vmem [thread:$0]  %s0, 32, %s18, [#allocation4]
    $region5: #{tpu_custom_call.1} parent=1 // pred_fallthru
      _
    // Predicated region
    $region6: #{tpu_custom_call.1} parent=1 // pred_check
      _
    $region7: #{tpu_custom_call.1} parent=1 // pred_check_branch
      %22 = sbr.rel (0) target = $region9
    $region8: #{tpu_custom_call.1} parent=1 // pred_region
      %s24 = ssub.s32 512, 512
      %25 = vsyncadd [#allocation7], %s24
      %s26 = sshll.u32 [#allocation6], 4
      %s27 = int_to_ptr.vmem [resolvable:$true] %s26
      %32 = dma.hbm_to_vmem [thread:$0]  %s1, 512, %s27, [#allocation7], 128, 128, 8
    $region9: #{tpu_custom_call.1} parent=1 // pred_fallthru
      _
    // Predicated region
    $region10: #{tpu_custom_call.1} parent=1 // pred_check
      _
    $region11: #{tpu_custom_call.1} parent=1 // pred_check_branch
      %34 = sbr.rel (0) target = $region13
    $region12: #{tpu_custom_call.1} parent=1 // pred_region
      _
    $region13: #{tpu_custom_call.1} parent=1 // pred_fallthru
      _
    // Predicated region
    $region14: #{tpu_custom_call.1} parent=1 // pred_check
      _
    $region15: #{tpu_custom_call.1} parent=1 // pred_check_branch
      %36 = sbr.rel (0) target = $region17
    $region16: #{tpu_custom_call.1} parent=1 // pred_region
      %37 = dma.done [#allocation4], 32
    $region17: #{tpu_custom_call.1} parent=1 // pred_fallthru
      _
    // Predicated region
    $region18: #{tpu_custom_call.1} parent=1 // pred_check
      _
    $region19: #{tpu_custom_call.1} parent=1 // pred_check_branch
      %39 = sbr.rel (0) target = $region21
    $region20: #{tpu_custom_call.1} parent=1 // pred_region
      %40 = dma.done [#allocation7], 512
    $region21: #{tpu_custom_call.1} parent=1 // pred_fallthru
      _
    %p42 = scmp.eq.s32.totalorder 0, 0
    // Predicated region
    $region22: #{tpu_custom_call.1} parent=1 // pred_check
      %p43 = pneg %p42
    $region23: #{tpu_custom_call.1} parent=1 // pred_check_branch
      %45 = sbr.rel (%p43) target = $region25
    $region24: #{tpu_custom_call.1} parent=1 // pred_region
      %vm46 = vcmask 779264
      %47 = vst.msk [vmem:[#allocation2] sm:$0x3] %vm46, 0.0
    $region25: #{tpu_custom_call.1} parent=1 // pred_fallthru
      _
    %v48 = vld [vmem:[#allocation3] sm:$0x3]
    %v49 = vxor.u32 %v48, 2147483648
    %v50 = vmul.f32 %v49, 1.442695
    %v51 = vpow.pop %v50
    %v52 = vadd.f32 %v51, 1.0
    %v53 = vrcp.pop %v52
    %v54 = vmul.f32 1.0, %v53
    %v55 = vmul.f32 %v48, %v54
    %v56 = vld [vmem:[#allocation2] sm:$0x3]
    %v57 = vpack.c.bf16 %v55, %v55
    %v58 = vld [vmem:[#allocation6] sm:$0xff]
    %v59 = vld [vmem:[#allocation6 + $0x8] sm:$0xff]
    %v60 = vld [vmem:[#allocation6 + $0x10] sm:$0xff]
    %v61 = vld [vmem:[#allocation6 + $0x18] sm:$0xff]
    %v62 = vpack.c.bf16 %v59, %v58
    %v63 = vpack.c.bf16 %v61, %v60
    %vm64 = vcmask 261120
    %v66 = vsel %vm64, %v57, 0
    %68 = vmatprep.subr.bf16.mxu0 0
    %69 = vmatpush1.bf16.msra.mxu0 0
    %70 = vmatprep.subr.bf16.mxu0 0
    %71 = vmatpush1.bf16.msra.mxu0 0
    %72 = vmatprep.subr.bf16.mxu0 0
    %73 = vmatpush1.bf16.msra.mxu0 0
    %74 = vmatprep.subr.bf16.mxu0 0
    %75 = vmatpush1.bf16.msra.mxu0 0
    %76 = vmatprep.subr.bf16.mxu0 0
    %77 = vmatpush1.bf16.msra.mxu0 0
    %78 = vmatprep.subr.bf16.mxu0 0
    %79 = vmatpush1.bf16.msra.mxu0 0
    %80 = vmatprep.subr.bf16.mxu0 0
    %81 = vmatpush1.bf16.msra.mxu0 %v63
    %82 = vmatprep.subr.bf16.mxu0 0
    %83 = vmatpush1.bf16.msra.mxu0 %v62
    %84 = vmatprep.subr.bf16.mxu0 0
    %85 = vmatpush2.bf16.msra.mxu0 0
    %86 = vmatprep.subr.bf16.mxu0 0
    %87 = vmatpush2.bf16.msra.mxu0 0
    %88 = vmatprep.subr.bf16.mxu0 0
    %89 = vmatpush2.bf16.msra.mxu0 0
    %90 = vmatprep.subr.bf16.mxu0 0
    %91 = vmatpush2.bf16.msra.mxu0 0
    %92 = vmatprep.subr.bf16.mxu0 0
    %93 = vmatpush2.bf16.msra.mxu0 0
    %94 = vmatprep.subr.bf16.mxu0 0
    %95 = vmatpush2.bf16.msra.mxu0 0
    %96 = vmatprep.subr.bf16.mxu0 0
    %97 = vmatpush2.bf16.msra.mxu0 0
    %98 = vmatprep.subr.bf16.mxu0 0
    %99 = vmatpush2.bf16.msra.mxu0 0
    %100 = vmatprep.mubr.bf16.mxu0 0
    %101 = vmatmul.mubr.bf16.gmra.mxu0 %v66
    %v102 = vpop.f32.mrf.mxu0
    %v103 = vadd.f32 0.0, %v102
    %v104 = vpop.f32.mrf.mxu0
    %v105 = vpop.f32.mrf.mxu0
    %v106 = vpop.f32.mrf.mxu0
    %107 = vdwg.mxu0
    %v108 = vadd.f32 %v56, %v103
    %vm109 = vcmask 779264
    %110 = vst.msk [vmem:[#allocation2] sm:$0x3] %vm109, %v108
    // Predicated region
    $region26: #{tpu_custom_call.1} parent=1 // pred_check
      %p111 = pneg %p42
    $region27: #{tpu_custom_call.1} parent=1 // pred_check_branch
      %113 = sbr.rel (%p111) target = $region29
    $region28: #{tpu_custom_call.1} parent=1 // pred_region
      %v114 = vld [vmem:[#allocation2] sm:$0x3]
      %v115 = vld [vmem:[%s2] sm:$0x1]
      %v117 = vlaneseq
      %v118 = vshrl.u32 %v117, 7
      %v119 = vsub.s32 0, %v118
      %v120 = vrot.slane %v115, %v119
      %v122 = vadd.f32 %v114, %v120
      %123 = vst.msk [vmem:[#allocation8] sm:$0x3] %vm109, %v122
    $region29: #{tpu_custom_call.1} parent=1 // pred_fallthru
      _
    // Predicated region
    $region30: #{tpu_custom_call.1} parent=1 // pred_check
      _
    $region31: #{tpu_custom_call.1} parent=1 // pred_check_branch
      %125 = sbr.rel (0) target = $region33
    $region32: #{tpu_custom_call.1} parent=1 // pred_region
      %s127 = ssub.s32 32, 32
      %128 = vsyncadd [#allocation5], %s127
      %s130 = sshll.u32 [#allocation8], 4
      %s131 = int_to_ptr.vmem [resolvable:$true] %s130
      %133 = dma.vmem_to_hbm [thread:$0]  %s131, 32, %s3, [#allocation5]
    $region33: #{tpu_custom_call.1} parent=1 // pred_fallthru
      _
    // Predicated region
    $region34: #{tpu_custom_call.1} parent=1 // pred_check
      _
    $region35: #{tpu_custom_call.1} parent=1 // pred_check_branch
      %135 = sbr.rel (0) target = $region37
    $region36: #{tpu_custom_call.1} parent=1 // pred_region
      %136 = dma.done [#allocation5], 32
    $region37: #{tpu_custom_call.1} parent=1 // pred_fallthru
      _
    %137 = vsyncpa [#allocation4], 1
    %138 = vsyncpa [#allocation7], 1
    %139 = vsyncpa [#allocation5], 1

</llo_original>
